<compile_context>
chip_gen: v7x
topology: tpu7x:2x2x1
jax: 0.10.0
libtpu: 0.0.40
codegen_flags: <defaults>
</compile_context>

<pallas_src>
import functools

import jax
import jax.numpy as jnp
from jax.experimental import pallas as pl
from jax.experimental.pallas import tpu as pltpu


def _dense_ce_kernel(x_ref, t_ref, loss_ref, *, true_b, tile_b, mask_tail):
    """One batch tile.

    Per-row loss in algebraic form (no logprobs materialized):
        loss = (m + log(sum(exp(x - m)))) * sum(t) - sum(t * x)
    Writes the per-row losses lane-dense as a (1, 1, tile_b) block.
    """
    x = x_ref[...].astype(jnp.float32)   # (tile_b, C)
    t = t_ref[...].astype(jnp.float32)   # (tile_b, C)

    if mask_tail:
        # Rows past the true batch come from a partial edge block (undefined
        # contents). Mask BOTH x and t so those rows contribute exactly 0 and
        # cannot inject NaN/Inf into their (discarded) per-row math.
        row = pl.program_id(0) * tile_b + jax.lax.broadcasted_iota(
            jnp.int32, (x.shape[0], 1), 0)
        valid = row < true_b
        x = jnp.where(valid, x, 0.0)
        t = jnp.where(valid, t, 0.0)

    m = jnp.max(x, axis=-1, keepdims=True)                 # (tile_b, 1)
    se = jnp.sum(jnp.exp(x - m), axis=-1)                  # (tile_b,)
    lse = m[:, 0] + jnp.log(se)                            # (tile_b,)
    sum_t = jnp.sum(t, axis=-1)                            # (tile_b,)
    sum_tx = jnp.sum(t * x, axis=-1)                       # (tile_b,)
    loss = lse * sum_t - sum_tx                            # (tile_b,)

    loss_ref[...] = loss.reshape(1, 1, loss.shape[0])


def _sublane(dtype) -> int:
    # (8,128) tiling for 32-bit dtypes, (16,128) for 16-bit, (32,128) for 8-bit.
    return max(8, 32 // jnp.dtype(dtype).itemsize)


def dense_cross_entropy(x, target, *, tile_b=None):
    """Pallas TPU implementation of DenseCrossEntropy.forward (mean reduction)."""
    assert x.shape == target.shape and x.ndim == 2
    B, C = x.shape

    sub = max(_sublane(x.dtype), _sublane(target.dtype))
    in_itemsize = jnp.dtype(x.dtype).itemsize + jnp.dtype(target.dtype).itemsize

    # Scoped VMEM limit: half of physical per-TC VMEM (64 MiB on 128-MiB
    # v5e/v6e, 32 MiB on 64-MiB/TC v7x). Conservative fallback (64 MiB cap)
    # is safe on every current generation if the query fails.
    try:
        vmem_cap = pltpu.get_tpu_info().vmem_capacity_bytes
    except Exception:
        vmem_cap = 64 * 1024 * 1024
    vmem_limit = min(vmem_cap // 2, 64 * 1024 * 1024)

    if tile_b is None:
        # Per-tile VMEM model: 2x double-buffered (lane-padded) inputs plus
        # ~3 live (tile_b, C_pad) f32 temporaries inside the kernel body.
        c_pad = ((C + 127) // 128) * 128
        bytes_per_row = 2 * c_pad * in_itemsize + 3 * c_pad * 4
        budget = (vmem_limit * 3) // 4
        tile_from_vmem = max(sub, (budget // bytes_per_row) // sub * sub)
        # Cap tiles (~512 rows already ~85% of the HBM roofline) and aim for
        # >= 4 grid steps so the 'parallel' axis shards across both TCs on v7x
        # and there is something to software-pipeline.
        tile_for_grid = (((B + 3) // 4) + sub - 1) // sub * sub
        tile_b = max(sub, min(tile_from_vmem, 1024, tile_for_grid))
    assert tile_b % sub == 0, f"tile_b must be a multiple of {sub} for these dtypes"

    grid_b = (B + tile_b - 1) // tile_b
    mask_tail = (B % tile_b) != 0

    cost = pl.CostEstimate(
        flops=6 * B * C,
        transcendentals=B * C + B,                      # exp per element + log per row
        bytes_accessed=B * C * in_itemsize + grid_b * tile_b * 4,
    )

    kernel = functools.partial(
        _dense_ce_kernel, true_b=B, tile_b=tile_b, mask_tail=mask_tail)

    per_row = pl.pallas_call(
        kernel,
        out_shape=jax.ShapeDtypeStruct((grid_b, 1, tile_b), jnp.float32),
        grid_spec=pltpu.PrefetchScalarGridSpec(
            num_scalar_prefetch=0,
            grid=(grid_b,),
            in_specs=[
                pl.BlockSpec((tile_b, C), lambda i: (i, 0)),
                pl.BlockSpec((tile_b, C), lambda i: (i, 0)),
            ],
            out_specs=pl.BlockSpec((1, 1, tile_b), lambda i: (i, 0, 0)),
        ),
        compiler_params=pltpu.CompilerParams(
            dimension_semantics=("parallel",),
            vmem_limit_bytes=vmem_limit,
        ),
        cost_estimate=cost,
    )(x, target)

    # Rows past the true batch are exactly 0 (masked), so sum everything / B.
    return jnp.sum(per_row) / jnp.float32(B)


def _reference(x, target):
    x = x.astype(jnp.float32)
    target = target.astype(jnp.float32)
    logprobs = jax.nn.log_softmax(x, axis=-1)
    return (-(logprobs * target).sum(-1)).mean()


if __name__ == "__main__":
    key = jax.random.PRNGKey(0)
    k1, k2, k3, k4 = jax.random.split(key, 4)

    # Case 1: small f32 inputs (matches the module's basic contract).
    B, C = 8, 32
    x = jax.random.normal(k1, (B, C), dtype=jnp.float32)
    target = jax.nn.softmax(
        jax.random.normal(k2, (B, C), dtype=jnp.float32), axis=-1
    )
    loss = jax.block_until_ready(dense_cross_entropy(x, target))
    ref = _reference(x, target)
    assert jnp.allclose(loss, ref, atol=1e-5, rtol=1e-5), (loss, ref)

    # Case 2: bf16 inputs, ragged batch, explicit multi-tile grid
    # (exercises in-kernel tail masking, multi-step 'parallel' grid, upcast).
    B2, C2 = 300, 640
    x2 = jax.random.normal(k3, (B2, C2), dtype=jnp.float32).astype(jnp.bfloat16)
    t2 = jax.nn.softmax(
        jax.random.normal(k4, (B2, C2), dtype=jnp.float32), axis=-1
    ).astype(jnp.bfloat16)
    loss2 = jax.block_until_ready(dense_cross_entropy(x2, t2, tile_b=64))
    ref2 = _reference(x2, t2)
    assert jnp.allclose(loss2, ref2, atol=1e-4, rtol=1e-4), (loss2, ref2)

    print("KERNEL_OK")
</pallas_src>

<mosaic_0001>
module attributes {stable_mosaic.version = 11 : i64} {
  func.func @_dense_ce_kernel(%arg0: i32, %arg1: memref<8x32xf32, #tpu.memory_space<vmem>>, %arg2: memref<8x32xf32, #tpu.memory_space<vmem>>, %arg3: memref<1x1x8xf32, #tpu.memory_space<vmem>>) attributes {dimension_semantics = [#tpu.dimension_semantics<parallel>], iteration_bounds = array<i64: 1>, scalar_prefetch = 0 : i64, scratch_operands = 0 : i64, tpu.core_type = #tpu.core_type<tc>, window_params = [{transform_indices = @transform_0, window_bounds = array<i64: 8, 32>}, {transform_indices = @transform_1, window_bounds = array<i64: 8, 32>}, {transform_indices = @transform_2, window_bounds = array<i64: 1, 1, 8>}]} {
    %c0 = arith.constant 0 : index
    %c0_0 = arith.constant 0 : index
    %0 = vector.load %arg1[%c0, %c0_0] : memref<8x32xf32, #tpu.memory_space<vmem>>, vector<8x32xf32>
    %c0_1 = arith.constant 0 : index
    %c0_2 = arith.constant 0 : index
    %1 = vector.load %arg2[%c0_1, %c0_2] : memref<8x32xf32, #tpu.memory_space<vmem>>, vector<8x32xf32>
    %cst = arith.constant dense<0xFF800000> : vector<8xf32>
    %2 = vector.multi_reduction <maximumf>, %0, %cst [1] : vector<8x32xf32> to vector<8xf32>
    %3 = vector.shape_cast %2 : vector<8xf32> to vector<8x1xf32>
    %4 = vector.broadcast %3 : vector<8x1xf32> to vector<8x32xf32>
    %5 = arith.subf %0, %4 : vector<8x32xf32>
    %6 = math.exp %5 : vector<8x32xf32>
    %cst_3 = arith.constant dense<0.000000e+00> : vector<8xf32>
    %7 = vector.multi_reduction <add>, %6, %cst_3 [1] : vector<8x32xf32> to vector<8xf32>
    %8 = vector.shape_cast %3 : vector<8x1xf32> to vector<8xf32>
    %9 = math.log %7 : vector<8xf32>
    %10 = arith.addf %8, %9 : vector<8xf32>
    %cst_4 = arith.constant dense<0.000000e+00> : vector<8xf32>
    %11 = vector.multi_reduction <add>, %1, %cst_4 [1] : vector<8x32xf32> to vector<8xf32>
    %12 = arith.mulf %1, %0 : vector<8x32xf32>
    %cst_5 = arith.constant dense<0.000000e+00> : vector<8xf32>
    %13 = vector.multi_reduction <add>, %12, %cst_5 [1] : vector<8x32xf32> to vector<8xf32>
    %14 = arith.mulf %10, %11 : vector<8xf32>
    %15 = arith.subf %14, %13 : vector<8xf32>
    %16 = vector.shape_cast %15 : vector<8xf32> to vector<1x1x8xf32>
    %c0_6 = arith.constant 0 : index
    %c0_7 = arith.constant 0 : index
    %c0_8 = arith.constant 0 : index
    %17 = vector.load %arg3[%c0_6, %c0_7, %c0_8] : memref<1x1x8xf32, #tpu.memory_space<vmem>>, vector<1x1x8xf32>
    tpu.vector_store %arg3[%c0_6, %c0_7, %c0_8], %16 {strides = array<i32>} : memref<1x1x8xf32, #tpu.memory_space<vmem>>, vector<1x1x8xf32>,
    return
  }
  func.func @transform_0(%arg0: i32) -> (i32, i32) {
    %c0_i32 = arith.constant 0 : i32
    %c0_i32_0 = arith.constant 0 : i32
    return %arg0, %c0_i32 : i32, i32
  }
  func.func @transform_1(%arg0: i32) -> (i32, i32) {
    %c0_i32 = arith.constant 0 : i32
    %c0_i32_0 = arith.constant 0 : i32
    return %arg0, %c0_i32 : i32, i32
  }
  func.func @transform_2(%arg0: i32) -> (i32, i32, i32) {
    %c0_i32 = arith.constant 0 : i32
    %c0_i32_0 = arith.constant 0 : i32
    %c0_i32_1 = arith.constant 0 : i32
    return %arg0, %c0_i32, %c0_i32_0 : i32, i32, i32
  }
}

</mosaic_0001>

<llo_original>
// kernel: tpu_custom_call.1
$region0: #{tpu_custom_call.1}
  #allocation0 [shape = 'u32[]', space=smem, size = 0x4, offset = 0x4, fixed_abs, tag = 'smem constant byte address 0x4 - core index']
  #allocation1 [shape = 'u32[144,128]{1,0:T(1,128)}', space=vmem, size = 0x12000, scoped, tag = 'internal scratch']
  %s0 = inlined_call_operand.hbm [shape: f32[8,32], index: 0, kind: input, shape index: {}]
  %s1 = inlined_call_operand.hbm [shape: f32[8,32], index: 1, kind: input, shape index: {}]
  %s2 = inlined_call_operand.hbm [shape: f32[1,1,8], index: 2, kind: output, shape index: {}]
  %s3 = sld [smem:[#allocation0]]
  $region26: #{tpu_custom_call.1} parent=0
    _
  %s5 = ssub.s32 1, %s3
  %s6 = scalar_select 0, %s5, %s3
  $region1: #{tpu_custom_call.1} parent=0
    #allocation2 [shape = 'u8[4096]{0}', space=vmem, size = 0x1000, scoped, tag = 'input window, operand 0, single buffered']
    #allocation3 [shape = 's32[1]{0}', space=sflag, size = 0x4, scoped, tag = 'scoped memory for tpu_custom_call.1']
    #allocation4 [shape = 's32[1]{0}', space=sflag, size = 0x4, scoped, tag = 'scoped memory for tpu_custom_call.1']
    #allocation5 [shape = 'u8[4096]{0}', space=vmem, size = 0x1000, scoped, tag = 'input window, operand 1, single buffered']
    #allocation6 [shape = 's32[1]{0}', space=sflag, size = 0x4, scoped, tag = 'scoped memory for tpu_custom_call.1']
    #allocation7 [shape = 'u8[512]{0}', space=vmem, size = 0x400, scoped, tag = 'output window, operand 0, single buffered']
    %7 = vsyncpa [#allocation3], 0
    %8 = vsyncpa [#allocation6], 0
    %9 = vsyncpa [#allocation4], 0
    // Predicated region
    $region2: #{tpu_custom_call.1} parent=1 // pred_check
      _
    $region3: #{tpu_custom_call.1} parent=1 // pred_check_branch
      %11 = sbr.rel (0) target = $region5
    $region4: #{tpu_custom_call.1} parent=1 // pred_region
      %s13 = ssub.s32 128, 128
      %14 = vsyncadd [#allocation3], %s13
      %s16 = sshll.u32 [#allocation2], 4
      %s17 = int_to_ptr.vmem [resolvable:$true] %s16
      %19 = dma.hbm_to_vmem [thread:$0]  %s0, 128, %s17, [#allocation3]
    $region5: #{tpu_custom_call.1} parent=1 // pred_fallthru
      _
    // Predicated region
    $region6: #{tpu_custom_call.1} parent=1 // pred_check
      _
    $region7: #{tpu_custom_call.1} parent=1 // pred_check_branch
      %21 = sbr.rel (0) target = $region9
    $region8: #{tpu_custom_call.1} parent=1 // pred_region
      %s23 = ssub.s32 128, 128
      %24 = vsyncadd [#allocation6], %s23
      %s26 = sshll.u32 [#allocation5], 4
      %s27 = int_to_ptr.vmem [resolvable:$true] %s26
      %29 = dma.hbm_to_vmem [thread:$0]  %s1, 128, %s27, [#allocation6]
    $region9: #{tpu_custom_call.1} parent=1 // pred_fallthru
      _
    // Predicated region
    $region10: #{tpu_custom_call.1} parent=1 // pred_check
      _
    $region11: #{tpu_custom_call.1} parent=1 // pred_check_branch
      %31 = sbr.rel (0) target = $region13
    $region12: #{tpu_custom_call.1} parent=1 // pred_region
      %32 = dma.done [#allocation3], 128
    $region13: #{tpu_custom_call.1} parent=1 // pred_fallthru
      _
    // Predicated region
    $region14: #{tpu_custom_call.1} parent=1 // pred_check
      _
    $region15: #{tpu_custom_call.1} parent=1 // pred_check_branch
      %34 = sbr.rel (0) target = $region17
    $region16: #{tpu_custom_call.1} parent=1 // pred_region
      %35 = dma.done [#allocation6], 128
    $region17: #{tpu_custom_call.1} parent=1 // pred_fallthru
      _
    %v36 = vld [vmem:[#allocation2] sm:$0xff]
    %v37 = vld [vmem:[#allocation5] sm:$0xff]
    %vm38 = vcmask 261120
    %v39 = vsel %vm38, %v36, -inf
    %40 = vmax.xlane.f32.xlu0 %v39
    %v41 = vpop.xlane.xlu0 %40
    %v42 = vsub.f32 %v36, %v41
    %v43 = vmul.f32 %v42, 1.442695
    %v44 = vpow.pop %v43
    %v45 = vsel %vm38, %v44, 0.0
    %46 = vadd.xlane.f32.xlu0 %v45
    %v47 = vpop.xlane.xlu0 %46
    %v48 = vlog2.pop %v47
    %v49 = vmul.f32 %v48, 0.6931472
    %v50 = vadd.f32 %v41, %v49
    %v51 = vsel %vm38, %v37, 0.0
    %52 = vadd.xlane.f32.xlu0 %v51
    %v53 = vpop.xlane.xlu0 %52
    %v54 = vmul.f32 %v37, %v36
    %v55 = vsel %vm38, %v54, 0.0
    %56 = vadd.xlane.f32.xlu0 %v55
    %v57 = vpop.xlane.xlu0 %56
    %v58 = vmul.f32 %v50, %v53
    %v59 = vsub.f32 %v58, %v57
    %v61 = vlaneseq
    %v62 = vand.u32 %v61, 127
    %v63 = vlaneseq
    %v64 = vshrl.u32 %v63, 7
    %v65 = vsub.s32 %v62, %v64
    %v66 = vrot.slane %v59, %v65
    %vm68 = vcmask 57344
    %69 = vst.msk [vmem:[#allocation7] sm:$0x1] %vm68, %v66
    // Predicated region
    $region18: #{tpu_custom_call.1} parent=1 // pred_check
      _
    $region19: #{tpu_custom_call.1} parent=1 // pred_check_branch
      %71 = sbr.rel (0) target = $region21
    $region20: #{tpu_custom_call.1} parent=1 // pred_region
      %s73 = ssub.s32 16, 16
      %74 = vsyncadd [#allocation4], %s73
      %s76 = sshll.u32 [#allocation7], 4
      %s77 = int_to_ptr.vmem [resolvable:$true] %s76
      %79 = dma.vmem_to_hbm [thread:$0]  %s77, 16, %s2, [#allocation4]
    $region21: #{tpu_custom_call.1} parent=1 // pred_fallthru
      _
    // Predicated region
    $region22: #{tpu_custom_call.1} parent=1 // pred_check
      _
    $region23: #{tpu_custom_call.1} parent=1 // pred_check_branch
      %81 = sbr.rel (0) target = $region25
    $region24: #{tpu_custom_call.1} parent=1 // pred_region
      %82 = dma.done [#allocation4], 16
    $region25: #{tpu_custom_call.1} parent=1 // pred_fallthru
      _
    %83 = vsyncpa [#allocation3], 1
    %84 = vsyncpa [#allocation6], 1
    %85 = vsyncpa [#allocation4], 1

</llo_original>
